<compile_context>
chip_gen: v5e
topology: v5e:2x2
jax: 0.10.0
libtpu: 0.0.40
codegen_flags: <defaults>
</compile_context>

<pallas_src>
import math
import numpy as np
import jax
import jax.numpy as jnp
from jax.experimental import pallas as pl
from jax.experimental.pallas import tpu as pltpu


# ----------------------------- generation-aware VMEM budget -------------------

def _detect_vmem_limit():
    """~70% of physical VMEM, capped at 100 MiB.
    v5e/v6e (128 MiB) -> ~89 MiB, v7x (64 MiB) -> ~45 MiB. Safe fallback ~45 MiB."""
    cap = 64 * 1024 * 1024
    try:
        info = pltpu.get_tpu_info()
        cap = int(getattr(info, "vmem_capacity_bytes", cap) or cap)
    except Exception:
        pass
    return int(min(cap * 0.7, 100 * 1024 * 1024))


_VMEM_LIMIT = _detect_vmem_limit()


def _params(dims):
    return pltpu.CompilerParams(dimension_semantics=dims, vmem_limit_bytes=_VMEM_LIMIT)


def _round_up(x, m):
    return ((x + m - 1) // m) * m


def _pick_tile(dim, target, align):
    """Largest multiple of `align` dividing `dim` and <= target; else the full dim.
    Edge-tiled kernels pad their row count to a multiple of `align` first, so the
    full-dim fallback only triggers on small / intentionally-resident axes."""
    if dim <= target:
        return dim
    t = (target // align) * align
    while t >= align:
        if dim % t == 0:
            return t
        t -= align
    return dim


def _pad_rows(a, mult):
    n = a.shape[0]
    pad = _round_up(n, mult) - n
    if pad == 0:
        return a
    return jnp.pad(a, ((0, pad),) + ((0, 0),) * (a.ndim - 1))


# ----------------------------- tiled GEMM (+bias) ---------------------------

def _matmul_kernel(a_ref, b_ref, o_ref):
    @pl.when(pl.program_id(2) == 0)
    def _():
        o_ref[...] = jnp.zeros_like(o_ref)
    o_ref[...] += jnp.dot(a_ref[...], b_ref[...], preferred_element_type=jnp.float32)


def _matmul_bias_kernel(a_ref, b_ref, bias_ref, o_ref):
    @pl.when(pl.program_id(2) == 0)
    def _():
        o_ref[...] = jnp.broadcast_to(bias_ref[...], o_ref.shape)
    o_ref[...] += jnp.dot(a_ref[...], b_ref[...], preferred_element_type=jnp.float32)


def matmul(a, b, bias=None, *, tm=512, tn=512, tk=512, min_flops=2_000_000):
    """(M,K)@(K,N) (+bias). Tiny problems go straight to jnp.dot (Pallas launch + per-step
    overhead dominates there); larger ones use the tiled Pallas GEMM accumulating directly
    in the resident f32 output block."""
    M, K = a.shape
    K2, N = b.shape
    assert K == K2
    if 2 * M * K * N < min_flops:
        out = jnp.dot(a, b, preferred_element_type=jnp.float32)
        return out + bias if bias is not None else out
    tm = _pick_tile(M, tm, 8)
    tk = _pick_tile(K, tk, 128)
    tn = _pick_tile(N, tn, 128)
    grid = (M // tm, N // tn, K // tk)
    in_specs = [pl.BlockSpec((tm, tk), lambda i, j, k: (i, k)),
                pl.BlockSpec((tk, tn), lambda i, j, k: (k, j))]
    args = (a, b)
    kernel = _matmul_kernel
    if bias is not None:
        in_specs = in_specs + [pl.BlockSpec((1, tn), lambda i, j, k: (0, j))]
        args = (a, b, bias.reshape(1, N).astype(jnp.float32))
        kernel = _matmul_bias_kernel
    return pl.pallas_call(
        kernel,
        out_shape=jax.ShapeDtypeStruct((M, N), jnp.float32),
        grid=grid,
        in_specs=in_specs,
        out_specs=pl.BlockSpec((tm, tn), lambda i, j, k: (i, j)),
        compiler_params=_params(("parallel", "parallel", "arbitrary")),
        cost_estimate=pl.CostEstimate(
            flops=2 * M * K * N, transcendentals=0,
            bytes_accessed=4 * (M * K + K * N + M * N)),
    )(*args)


# ------------------- fused SP projections (fc1_2..fc1_5 + hadamard) ---------

def _sp_proj_kernel(sp_ref, w2_ref, w3_ref, w4_ref, w5_ref, had_ref, x4_ref, x5_ref):
    sp = sp_ref[...]
    p2 = jnp.dot(sp, w2_ref[...], preferred_element_type=jnp.float32)
    p3 = jnp.dot(sp, w3_ref[...], preferred_element_type=jnp.float32)
    had_ref[...] = p2 * p3
    x4_ref[...] = jnp.dot(sp, w4_ref[...], preferred_element_type=jnp.float32)
    x5_ref[...] = jnp.dot(sp, w5_ref[...], preferred_element_type=jnp.float32)


def fused_sp_proj(SP, w2, w3, w4, w5, *, te=512):
    """One kernel / one SP read per tile for fc1_2..fc1_5; three SEPARATE outputs
    (had = fc1_2*fc1_3, X4, X5) so there is no in-kernel concat and no wrapper slicing."""
    E, F = SP.shape
    SPp = _pad_rows(SP, 8)
    Ep = SPp.shape[0]
    te = _pick_tile(Ep, te, 8)
    had, X4, X5 = pl.pallas_call(
        _sp_proj_kernel,
        out_shape=(jax.ShapeDtypeStruct((Ep, F), jnp.float32),
                   jax.ShapeDtypeStruct((Ep, F), jnp.float32),
                   jax.ShapeDtypeStruct((Ep, F), jnp.float32)),
        grid=(Ep // te,),
        in_specs=[pl.BlockSpec((te, F), lambda i: (i, 0))]
                 + [pl.BlockSpec((F, F), lambda i: (0, 0))] * 4,
        out_specs=(pl.BlockSpec((te, F), lambda i: (i, 0)),
                   pl.BlockSpec((te, F), lambda i: (i, 0)),
                   pl.BlockSpec((te, F), lambda i: (i, 0))),
        compiler_params=_params(("parallel",)),
        cost_estimate=pl.CostEstimate(
            flops=8 * Ep * F * F + Ep * F, transcendentals=0,
            bytes_accessed=4 * (Ep * F + 4 * F * F + 3 * Ep * F)),
    )(SPp, w2, w3, w4, w5)
    if Ep != E:
        had, X4, X5 = had[:E], X4[:E], X5[:E]
    return had, X4, X5


# --------------------------- batched (K,N,N) matmul --------------------------

def _bmm_kernel(a_ref, b_ref, o_ref):
    o_ref[...] = jax.lax.dot_general(
        a_ref[...], b_ref[...],
        dimension_numbers=(((2,), (1,)), ((0,), (0,))),
        preferred_element_type=jnp.float32)


def bmm(a, b):
    """Batched (K,N,N)@(K,N,N). kb channels per step, budgeted against the detected
    per-generation VMEM limit; kb is clamped so the channel grid has >= 2 steps
    (DMA/compute overlap + 2-TC split on v7x); row tiling bounds the A/O blocks.
    # TODO(synk): add contraction (j) tiling so the full (N,N) B channel slab is not
    #             required resident for very large N."""
    K, N, _ = a.shape
    ti = _pick_tile(N, 256, 8)
    budget = _VMEM_LIMIT // 3
    per_ch = 2 * 4 * (2 * ti * N + N * N)      # double-buffered A/O tiles + full B channel
    kb = max(1, min(K, budget // max(per_ch, 1)))
    if K >= 2:
        kb = min(kb, K // 2)
    while K % kb != 0:
        kb -= 1
    return pl.pallas_call(
        _bmm_kernel,
        out_shape=jax.ShapeDtypeStruct((K, N, N), jnp.float32),
        grid=(K // kb, N // ti),
        in_specs=[pl.BlockSpec((kb, ti, N), lambda k, i: (k, i, 0)),
                  pl.BlockSpec((kb, N, N), lambda k, i: (k, 0, 0))],
        out_specs=pl.BlockSpec((kb, ti, N), lambda k, i: (k, i, 0)),
        compiler_params=_params(("parallel", "parallel")),
        cost_estimate=pl.CostEstimate(
            flops=2 * K * N * N * N, transcendentals=0,
            bytes_accessed=4 * 3 * K * N * N),
    )(a, b)


# --------------------------- fused edge MLP (concat-free) --------------------

def _edge_mlp_kernel(sp_ref, had_ref, diag_ref, mm_ref,
                     w6a_ref, w6b_ref, w6c_ref, w6d_ref, w7_ref, o_ref):
    h = jnp.dot(sp_ref[...], w6a_ref[...], preferred_element_type=jnp.float32)
    h += jnp.dot(had_ref[...], w6b_ref[...], preferred_element_type=jnp.float32)
    h += jnp.dot(diag_ref[...], w6c_ref[...], preferred_element_type=jnp.float32)
    h += jnp.dot(mm_ref[...], w6d_ref[...], preferred_element_type=jnp.float32)
    h = jnp.maximum(h, 0.0)
    o_ref[...] = jnp.dot(h, w7_ref[...], preferred_element_type=jnp.float32)


def edge_mlp(SP, had, diag, mm, w6, w7, *, te=512):
    """fc1_7(relu(fc1_6([SP|had|diag|mm]))) without materializing the concatenated slab:
    fc1_6 is pre-split by rows and each piece is contracted in-kernel. Output lane dim is
    zero-padded to a 128 multiple (lane-dense stores) and sliced afterwards.
    # TODO(synk): tile the resident fc1_6/fc1_7 weights over the hidden dim for very large
    #             nedgeinput on v7x (64 MiB VMEM)."""
    E, F = SP.shape
    fmax = diag.shape[1]
    H = w6.shape[1]
    Cout = w7.shape[1]
    Cout_p = _round_up(Cout, 128)
    w7p = jnp.pad(w7, ((0, 0), (0, Cout_p - Cout)))
    w6a, w6b = w6[:F], w6[F:2 * F]
    w6c, w6d = w6[2 * F:2 * F + fmax], w6[2 * F + fmax:]
    SPp, hadp, diagp, mmp = (_pad_rows(t, 8) for t in (SP, had, diag, mm))
    Ep = SPp.shape[0]
    te = _pick_tile(Ep, te, 8)
    Cin = 3 * F + fmax
    out = pl.pallas_call(
        _edge_mlp_kernel,
        out_shape=jax.ShapeDtypeStruct((Ep, Cout_p), jnp.float32),
        grid=(Ep // te,),
        in_specs=[pl.BlockSpec((te, F), lambda i: (i, 0)),
                  pl.BlockSpec((te, F), lambda i: (i, 0)),
                  pl.BlockSpec((te, fmax), lambda i: (i, 0)),
                  pl.BlockSpec((te, F), lambda i: (i, 0)),
                  pl.BlockSpec((F, H), lambda i: (0, 0)),
                  pl.BlockSpec((F, H), lambda i: (0, 0)),
                  pl.BlockSpec((fmax, H), lambda i: (0, 0)),
                  pl.BlockSpec((F, H), lambda i: (0, 0)),
                  pl.BlockSpec((H, Cout_p), lambda i: (0, 0))],
        out_specs=pl.BlockSpec((te, Cout_p), lambda i: (i, 0)),
        compiler_params=_params(("parallel",)),
        cost_estimate=pl.CostEstimate(
            flops=2 * Ep * (Cin * H + H * Cout_p), transcendentals=0,
            bytes_accessed=4 * (Ep * Cin + Cin * H + H * Cout_p + Ep * Cout_p)),
    )(SPp, hadp, diagp, mmp, w6a, w6b, w6c, w6d, w7p)
    return out[:E, :Cout]


# --------------------------- SpectConv, fully fused ---------------------------

def _spect_conv_kernel(a_ref, x_ref, w_ref, b_ref, o_ref):
    @pl.when(pl.program_id(1) == 0)
    def _():
        o_ref[...] = jnp.broadcast_to(b_ref[...], o_ref.shape)
    s = jnp.dot(a_ref[0], x_ref[...], preferred_element_type=jnp.float32)   # (tm, ninp)
    o_ref[...] += jnp.dot(s, w_ref[0], preferred_element_type=jnp.float32)  # (tm, nout_p)


def spect_conv(edge_attr, x, W, bias, edge_index, N):
    """sum_k A[k] @ x @ W[k] + bias as ONE fused kernel: grid (row-tiles, K), resident
    output accumulator over k. No (Kc*N, nout) relayout / transpose pass and no wide
    intermediate; output lane dim padded to 128 (lane-dense stores) then sliced."""
    ei0, ei1 = edge_index[0], edge_index[1]
    Kc = edge_attr.shape[1]
    ninp = x.shape[1]
    nout = W.shape[2]
    nout_p = _round_up(nout, 128)
    Wp = jnp.pad(W, ((0, 0), (0, 0), (0, nout_p - nout))).astype(jnp.float32)
    bp = jnp.pad(bias, (0, nout_p - nout)).reshape(1, nout_p).astype(jnp.float32)
    # dense per-channel adjacency maps; data-dependent scatter stays as JAX glue.
    A = jnp.zeros((Kc, N, N), jnp.float32).at[:, ei0, ei1].set(edge_attr.T)
    tm = _pick_tile(N, 256, 8)
    out = pl.pallas_call(
        _spect_conv_kernel,
        out_shape=jax.ShapeDtypeStruct((N, nout_p), jnp.float32),
        grid=(N // tm, Kc),
        in_specs=[pl.BlockSpec((1, tm, N), lambda i, k: (k, i, 0)),
                  pl.BlockSpec((N, ninp), lambda i, k: (0, 0)),
                  pl.BlockSpec((1, ninp, nout_p), lambda i, k: (k, 0, 0)),
                  pl.BlockSpec((1, nout_p), lambda i, k: (0, 0))],
        out_specs=pl.BlockSpec((tm, nout_p), lambda i, k: (i, 0)),
        compiler_params=_params(("parallel", "arbitrary")),
        cost_estimate=pl.CostEstimate(
            flops=2 * Kc * (N * N * ninp + N * ninp * nout_p), transcendentals=0,
            bytes_accessed=4 * (Kc * N * N + N * ninp + Kc * ninp * nout_p + N * nout_p)),
    )(A, x.astype(jnp.float32), Wp, bp)
    return out[:, :nout]


# ----------------------------- GMNLayer forward -----------------------------

def gmn_layer_forward(params, x, edge_index, SP, batch_node):
    """Mirrors GMNLayer.forward: returns (x_out, edge_attr)."""
    N = batch_node.shape[0]
    ei0, ei1 = edge_index[0], edge_index[1]
    F = SP.shape[1]

    # tmp_diag = diag(fcnode(x), edge_index)  — tiny GEMM routed to jnp.dot by the gate
    h_node = matmul(x, params["fcnode"])                               # (N, fmax)
    tmp_diag = jnp.where((ei0 == ei1)[:, None], h_node[ei0], 0.0)      # (E, fmax)

    # fc1_2..fc1_5 fused; three separate lane-contiguous outputs (no concat / no slicing)
    had, X4, X5 = fused_sp_proj(SP, params["fc1_2"], params["fc1_3"],
                                params["fc1_4"], params["fc1_5"])      # each (E, F)

    # matmulopti2: dense scatter -> batched matmul -> gather
    # TODO(synk): the dense (K,N,N) scatter/gather stays as JAX glue; a sparse gather-GEMM
    # over scalar-prefetched edge_index would avoid the O(F*N^3) work for sparse graphs.
    A = jnp.zeros((F, N, N), jnp.float32).at[:, ei0, ei1].set(X4.T)
    B = jnp.zeros((F, N, N), jnp.float32).at[:, ei0, ei1].set(X5.T)
    C = bmm(A, B)                                                      # (F, N, N)
    tmp_matmul = C[:, ei0, ei1].T                                      # (E, F)

    # concat-free fused edge MLP
    edge_attr = edge_mlp(SP, had, tmp_diag, tmp_matmul,
                         params["fc1_6"], params["fc1_7"])             # (E, nedgeoutput)

    # conv1 (SpectConv) as one fused kernel
    x_out = spect_conv(edge_attr, x, params["conv_w"], params["conv_b"], edge_index, N)
    return x_out, edge_attr


# ----------------------------- pure-JAX reference ---------------------------

def gmn_layer_reference(params, x, edge_index, SP, batch_node):
    N = batch_node.shape[0]
    ei0, ei1 = edge_index[0], edge_index[1]
    nedgeinput = SP.shape[1]

    h_node = x @ params["fcnode"]
    tmp_diag = jnp.where((ei0 == ei1)[:, None], h_node[ei0], 0.0)

    X4 = SP @ params["fc1_4"]
    X5 = SP @ params["fc1_5"]
    A = jnp.zeros((nedgeinput, N, N), jnp.float32).at[:, ei0, ei1].set(X4.T)
    B = jnp.zeros((nedgeinput, N, N), jnp.float32).at[:, ei0, ei1].set(X5.T)
    C = jnp.einsum("kij,kjl->kil", A, B)
    tmp_matmul = C[:, ei0, ei1].T

    had = (SP @ params["fc1_2"]) * (SP @ params["fc1_3"])
    tmp = jnp.concatenate([SP, had, tmp_diag, tmp_matmul], axis=1)
    edge_attr = jax.nn.relu(tmp @ params["fc1_6"]) @ params["fc1_7"]

    Kc = edge_attr.shape[1]
    Ac = jnp.zeros((Kc, N, N), jnp.float32).at[:, ei0, ei1].set(edge_attr.T)
    res = jnp.einsum("kij,jd->kid", Ac, x)
    x_out = jnp.einsum("kid,kdo->io", res, params["conv_w"]) + params["conv_b"]
    return x_out, edge_attr


# ----------------------------- parameter init -------------------------------

def glorot_uniform(key, shape):
    stdv = math.sqrt(6.0 / (shape[-2] + shape[-1]))
    return jax.random.uniform(key, shape, jnp.float32, -stdv, stdv)


def init_params(key, nedgeinput, nedgeoutput, ninp, nout1):
    fmax = max(nedgeinput, ninp)
    keys = jax.random.split(key, 8)
    return {
        "fc1_2": glorot_uniform(keys[0], (nedgeinput, nedgeinput)),
        "fc1_3": glorot_uniform(keys[1], (nedgeinput, nedgeinput)),
        "fc1_4": glorot_uniform(keys[2], (nedgeinput, nedgeinput)),
        "fc1_5": glorot_uniform(keys[3], (nedgeinput, nedgeinput)),
        "fc1_6": glorot_uniform(keys[4], (3 * nedgeinput + fmax, 8 * nedgeinput)),
        "fc1_7": glorot_uniform(keys[5], (8 * nedgeinput, nedgeoutput)),
        "fcnode": glorot_uniform(keys[6], (ninp, fmax)),
        "conv_w": glorot_uniform(keys[7], (nedgeoutput, ninp, nout1)),  # glorot over last two dims (as in SpectConv)
        "conv_b": jnp.zeros((nout1,), jnp.float32),
    }


# ----------------------------------- main -----------------------------------

if __name__ == "__main__":
    # small deterministic problem
    nedgeinput, nedgeoutput, ninp, nout1 = 4, 4, 8, 16
    N = 8                       # nodes
    # graph: all (i, j) pairs including self-loops -> E = N*N = 64 (no duplicate edges)
    ii, jj = jnp.meshgrid(jnp.arange(N), jnp.arange(N), indexing="ij")
    edge_index = jnp.stack([ii.reshape(-1), jj.reshape(-1)], axis=0).astype(jnp.int32)
    E = edge_index.shape[1]

    key = jax.random.PRNGKey(0)
    kx, ksp, kp = jax.random.split(key, 3)
    x = jax.random.normal(kx, (N, ninp), jnp.float32)
    SP = jax.random.normal(ksp, (E, nedgeinput), jnp.float32)
    batch_node = jnp.zeros((N,), jnp.float32)

    params = init_params(kp, nedgeinput, nedgeoutput, ninp, nout1)

    x_out, edge_attr = gmn_layer_forward(params, x, edge_index, SP, batch_node)
    x_out = jax.block_until_ready(x_out)
    edge_attr = jax.block_until_ready(edge_attr)

    # correctness check against a pure-JAX reference
    x_ref, ea_ref = gmn_layer_reference(params, x, edge_index, SP, batch_node)
    assert x_out.shape == (N, nout1) and edge_attr.shape == (E, nedgeoutput)
    np.testing.assert_allclose(np.asarray(x_out), np.asarray(x_ref), rtol=1e-4, atol=1e-4)
    np.testing.assert_allclose(np.asarray(edge_attr), np.asarray(ea_ref), rtol=1e-4, atol=1e-4)

    print("KERNEL_OK")
</pallas_src>

<mosaic_0001>
module attributes {stable_mosaic.version = 11 : i64} {
  func.func @_sp_proj_kernel(%arg0: i32, %arg1: memref<64x4xf32, #tpu.memory_space<vmem>>, %arg2: memref<4x4xf32, #tpu.memory_space<vmem>>, %arg3: memref<4x4xf32, #tpu.memory_space<vmem>>, %arg4: memref<4x4xf32, #tpu.memory_space<vmem>>, %arg5: memref<4x4xf32, #tpu.memory_space<vmem>>, %arg6: memref<64x4xf32, #tpu.memory_space<vmem>>, %arg7: memref<64x4xf32, #tpu.memory_space<vmem>>, %arg8: memref<64x4xf32, #tpu.memory_space<vmem>>) attributes {dimension_semantics = [#tpu.dimension_semantics<parallel>], iteration_bounds = array<i64: 1>, scalar_prefetch = 0 : i64, scratch_operands = 0 : i64, tpu.core_type = #tpu.core_type<tc>, window_params = [{transform_indices = @transform_0, window_bounds = array<i64: 64, 4>}, {pipeline_mode = #tpu.pipeline_mode<synchronous>, transform_indices = @transform_1, window_bounds = array<i64: 4, 4>}, {pipeline_mode = #tpu.pipeline_mode<synchronous>, transform_indices = @transform_2, window_bounds = array<i64: 4, 4>}, {pipeline_mode = #tpu.pipeline_mode<synchronous>, transform_indices = @transform_3, window_bounds = array<i64: 4, 4>}, {pipeline_mode = #tpu.pipeline_mode<synchronous>, transform_indices = @transform_4, window_bounds = array<i64: 4, 4>}, {transform_indices = @transform_5, window_bounds = array<i64: 64, 4>}, {transform_indices = @transform_6, window_bounds = array<i64: 64, 4>}, {transform_indices = @transform_7, window_bounds = array<i64: 64, 4>}]} {
    %c0 = arith.constant 0 : index
    %c0_0 = arith.constant 0 : index
    %0 = vector.load %arg1[%c0, %c0_0] : memref<64x4xf32, #tpu.memory_space<vmem>>, vector<64x4xf32>
    %c0_1 = arith.constant 0 : index
    %c0_2 = arith.constant 0 : index
    %1 = vector.load %arg2[%c0_1, %c0_2] : memref<4x4xf32, #tpu.memory_space<vmem>>, vector<4x4xf32>
    %cst = arith.constant dense<0.000000e+00> : vector<64x4xf32>
    %2 = tpu.matmul %0, %1, %cst {dimension_numbers = #tpu.dot_dimension_numbers<[1], [0], [0], [1], [0, 0, 1, 1], [], []>} : vector<64x4xf32>, vector<4x4xf32>, vector<64x4xf32> -> vector<64x4xf32>
    %c0_3 = arith.constant 0 : index
    %c0_4 = arith.constant 0 : index
    %3 = vector.load %arg3[%c0_3, %c0_4] : memref<4x4xf32, #tpu.memory_space<vmem>>, vector<4x4xf32>
    %cst_5 = arith.constant dense<0.000000e+00> : vector<64x4xf32>
    %4 = tpu.matmul %0, %3, %cst_5 {dimension_numbers = #tpu.dot_dimension_numbers<[1], [0], [0], [1], [0, 0, 1, 1], [], []>} : vector<64x4xf32>, vector<4x4xf32>, vector<64x4xf32> -> vector<64x4xf32>
    %5 = arith.mulf %2, %4 : vector<64x4xf32>
    %c0_6 = arith.constant 0 : index
    %c0_7 = arith.constant 0 : index
    %6 = vector.load %arg6[%c0_6, %c0_7] : memref<64x4xf32, #tpu.memory_space<vmem>>, vector<64x4xf32>
    tpu.vector_store %arg6[%c0_6, %c0_7], %5 {strides = array<i32>} : memref<64x4xf32, #tpu.memory_space<vmem>>, vector<64x4xf32>,
    %c0_8 = arith.constant 0 : index
    %c0_9 = arith.constant 0 : index
    %7 = vector.load %arg4[%c0_8, %c0_9] : memref<4x4xf32, #tpu.memory_space<vmem>>, vector<4x4xf32>
    %cst_10 = arith.constant dense<0.000000e+00> : vector<64x4xf32>
    %8 = tpu.matmul %0, %7, %cst_10 {dimension_numbers = #tpu.dot_dimension_numbers<[1], [0], [0], [1], [0, 0, 1, 1], [], []>} : vector<64x4xf32>, vector<4x4xf32>, vector<64x4xf32> -> vector<64x4xf32>
    %c0_11 = arith.constant 0 : index
    %c0_12 = arith.constant 0 : index
    %9 = vector.load %arg7[%c0_11, %c0_12] : memref<64x4xf32, #tpu.memory_space<vmem>>, vector<64x4xf32>
    tpu.vector_store %arg7[%c0_11, %c0_12], %8 {strides = array<i32>} : memref<64x4xf32, #tpu.memory_space<vmem>>, vector<64x4xf32>,
    %c0_13 = arith.constant 0 : index
    %c0_14 = arith.constant 0 : index
    %10 = vector.load %arg5[%c0_13, %c0_14] : memref<4x4xf32, #tpu.memory_space<vmem>>, vector<4x4xf32>
    %cst_15 = arith.constant dense<0.000000e+00> : vector<64x4xf32>
    %11 = tpu.matmul %0, %10, %cst_15 {dimension_numbers = #tpu.dot_dimension_numbers<[1], [0], [0], [1], [0, 0, 1, 1], [], []>} : vector<64x4xf32>, vector<4x4xf32>, vector<64x4xf32> -> vector<64x4xf32>
    %c0_16 = arith.constant 0 : index
    %c0_17 = arith.constant 0 : index
    %12 = vector.load %arg8[%c0_16, %c0_17] : memref<64x4xf32, #tpu.memory_space<vmem>>, vector<64x4xf32>
    tpu.vector_store %arg8[%c0_16, %c0_17], %11 {strides = array<i32>} : memref<64x4xf32, #tpu.memory_space<vmem>>, vector<64x4xf32>,
    return
  }
  func.func @transform_0(%arg0: i32) -> (i32, i32) {
    %c0_i32 = arith.constant 0 : i32
    %c0_i32_0 = arith.constant 0 : i32
    return %arg0, %c0_i32 : i32, i32
  }
  func.func @transform_1(%arg0: i32) -> (i32, i32) {
    %c0_i32 = arith.constant 0 : i32
    %c0_i32_0 = arith.constant 0 : i32
    %c0_i32_1 = arith.constant 0 : i32
    return %c0_i32, %c0_i32_0 : i32, i32
  }
  func.func @transform_2(%arg0: i32) -> (i32, i32) {
    %c0_i32 = arith.constant 0 : i32
    %c0_i32_0 = arith.constant 0 : i32
    %c0_i32_1 = arith.constant 0 : i32
    return %c0_i32, %c0_i32_0 : i32, i32
  }
  func.func @transform_3(%arg0: i32) -> (i32, i32) {
    %c0_i32 = arith.constant 0 : i32
    %c0_i32_0 = arith.constant 0 : i32
    %c0_i32_1 = arith.constant 0 : i32
    return %c0_i32, %c0_i32_0 : i32, i32
  }
  func.func @transform_4(%arg0: i32) -> (i32, i32) {
    %c0_i32 = arith.constant 0 : i32
    %c0_i32_0 = arith.constant 0 : i32
    %c0_i32_1 = arith.constant 0 : i32
    return %c0_i32, %c0_i32_0 : i32, i32
  }
  func.func @transform_5(%arg0: i32) -> (i32, i32) {
    %c0_i32 = arith.constant 0 : i32
    %c0_i32_0 = arith.constant 0 : i32
    return %arg0, %c0_i32 : i32, i32
  }
  func.func @transform_6(%arg0: i32) -> (i32, i32) {
    %c0_i32 = arith.constant 0 : i32
    %c0_i32_0 = arith.constant 0 : i32
    return %arg0, %c0_i32 : i32, i32
  }
  func.func @transform_7(%arg0: i32) -> (i32, i32) {
    %c0_i32 = arith.constant 0 : i32
    %c0_i32_0 = arith.constant 0 : i32
    return %arg0, %c0_i32 : i32, i32
  }
}

</mosaic_0001>

<llo_original>
// kernel: tpu_custom_call.1
$region0: #{tpu_custom_call.1}
  #allocation0 [shape = 'u32[]', space=smem, size = 0x4, offset = 0x4, fixed_abs, tag = 'smem constant byte address 0x4 - core index']
  #allocation1 [shape = 'u32[72,128]{1,0:T(1,128)}', space=vmem, size = 0x9000, scoped, tag = 'internal scratch']
  %s0 = inlined_call_operand.vmem [shape: f32[64,4], index: 0, kind: input, shape index: {}]
  %s1 = inlined_call_operand.vmem [shape: f32[4,4], index: 1, kind: input, shape index: {}]
  %s2 = inlined_call_operand.vmem [shape: f32[4,4], index: 2, kind: input, shape index: {}]
  %s3 = inlined_call_operand.vmem [shape: f32[4,4], index: 3, kind: input, shape index: {}]
  %s4 = inlined_call_operand.vmem [shape: f32[4,4], index: 4, kind: input, shape index: {}]
  %s5 = inlined_call_operand.vmem [shape: f32[64,4], index: 5, kind: output, shape index: {0}]
  %s6 = inlined_call_operand.vmem [shape: f32[64,4], index: 6, kind: output, shape index: {1}]
  %s7 = inlined_call_operand.vmem [shape: f32[64,4], index: 7, kind: output, shape index: {2}]
  %8 = xla_tuple %s5, %s6, %s7
  %s9 = sld [smem:[#allocation0]]
  $region46: #{tpu_custom_call.1} parent=0
    _
  %s11 = ssub.s32 1, %s9
  %s12 = scalar_select 0, %s11, %s9
  // Predicated region
  $region2: #{tpu_custom_call.1} parent=0 // pred_check
    _
  $region3: #{tpu_custom_call.1} parent=0 // pred_check_branch
    %14 = sbr.rel (0) target = $region5
  $region4: #{tpu_custom_call.1} parent=0 // pred_region
    _
  $region5: #{tpu_custom_call.1} parent=0 // pred_fallthru
    _
  // Predicated region
  $region6: #{tpu_custom_call.1} parent=0 // pred_check
    _
  $region7: #{tpu_custom_call.1} parent=0 // pred_check_branch
    %16 = sbr.rel (0) target = $region9
  $region8: #{tpu_custom_call.1} parent=0 // pred_region
    _
  $region9: #{tpu_custom_call.1} parent=0 // pred_fallthru
    _
  // Predicated region
  $region10: #{tpu_custom_call.1} parent=0 // pred_check
    _
  $region11: #{tpu_custom_call.1} parent=0 // pred_check_branch
    %18 = sbr.rel (0) target = $region13
  $region12: #{tpu_custom_call.1} parent=0 // pred_region
    _
  $region13: #{tpu_custom_call.1} parent=0 // pred_fallthru
    _
  // Predicated region
  $region14: #{tpu_custom_call.1} parent=0 // pred_check
    _
  $region15: #{tpu_custom_call.1} parent=0 // pred_check_branch
    %20 = sbr.rel (0) target = $region17
  $region16: #{tpu_custom_call.1} parent=0 // pred_region
    _
  $region17: #{tpu_custom_call.1} parent=0 // pred_fallthru
    _
  // Predicated region
  $region18: #{tpu_custom_call.1} parent=0 // pred_check
    _
  $region19: #{tpu_custom_call.1} parent=0 // pred_check_branch
    %22 = sbr.rel (0) target = $region21
  $region20: #{tpu_custom_call.1} parent=0 // pred_region
    _
  $region21: #{tpu_custom_call.1} parent=0 // pred_fallthru
    _
  %v23 = vld [vmem:[%s0] sm:$0xff]
  %v24 = vld [vmem:[%s0 + $0x8] sm:$0xff]
  %v25 = vld [vmem:[%s0 + $0x10] sm:$0xff]
  %v26 = vld [vmem:[%s0 + $0x18] sm:$0xff]
  %v27 = vld [vmem:[%s0 + $0x20] sm:$0xff]
  %v28 = vld [vmem:[%s0 + $0x28] sm:$0xff]
  %v29 = vld [vmem:[%s0 + $0x30] sm:$0xff]
  %v30 = vld [vmem:[%s0 + $0x38] sm:$0xff]
  %v31 = vld [vmem:[%s1] sm:$0xf]
  %vm32 = vcmask 31744
  %v34 = vsel %vm32, %v23, 0
  %v37 = vsel %vm32, %v24, 0
  %v40 = vsel %vm32, %v25, 0
  %v43 = vsel %vm32, %v26, 0
  %v46 = vsel %vm32, %v27, 0
  %v49 = vsel %vm32, %v28, 0
  %v52 = vsel %vm32, %v29, 0
  %v55 = vsel %vm32, %v30, 0
  %vm57 = vcmask 1043456
  %v59 = vsel %vm57, %v31, 0
  %61 = vmatpush.msra.mxu0 0.0
  %62 = vmatpush.msra.mxu0 0.0
  %63 = vmatpush.msra.mxu0 0.0
  %64 = vmatpush.msra.mxu0 0.0
  %65 = vmatpush.msra.mxu0 0.0
  %66 = vmatpush.msra.mxu0 0.0
  %67 = vmatpush.msra.mxu0 0.0
  %68 = vmatpush.msra.mxu0 0.0
  %69 = vmatpush.msra.mxu0 0.0
  %70 = vmatpush.msra.mxu0 0.0
  %71 = vmatpush.msra.mxu0 0.0
  %72 = vmatpush.msra.mxu0 0.0
  %73 = vmatpush.msra.mxu0 0.0
  %74 = vmatpush.msra.mxu0 0.0
  %75 = vmatpush.msra.mxu0 0.0
  %76 = vmatpush.msra.mxu0 %v59
  %77 = vmatmul.f32.gmra.mxu0 %v34
  %v78 = vpop.f32.mrf.mxu0
  %v79 = vadd.f32 0.0, %v78
  %80 = vmatmul.f32.gmra.mxu0 %v37
  %v81 = vpop.f32.mrf.mxu0
  %v82 = vadd.f32 0.0, %v81
  %83 = vmatmul.f32.gmra.mxu0 %v40
  %v84 = vpop.f32.mrf.mxu0
  %v85 = vadd.f32 0.0, %v84
  %86 = vmatmul.f32.gmra.mxu0 %v43
  %v87 = vpop.f32.mrf.mxu0
  %v88 = vadd.f32 0.0, %v87
  %89 = vmatmul.f32.gmra.mxu0 %v46
  %v90 = vpop.f32.mrf.mxu0
  %v91 = vadd.f32 0.0, %v90
  %92 = vmatmul.f32.gmra.mxu0 %v49
  %v93 = vpop.f32.mrf.mxu0
  %v94 = vadd.f32 0.0, %v93
  %95 = vmatmul.f32.gmra.mxu0 %v52
  %v96 = vpop.f32.mrf.mxu0
  %v97 = vadd.f32 0.0, %v96
  %98 = vmatmul.f32.gmra.mxu0 %v55
  %v99 = vpop.f32.mrf.mxu0
  %v100 = vadd.f32 0.0, %v99
  %101 = vdwg.mxu0
  %v102 = vld [vmem:[%s2] sm:$0xf]
  %v104 = vsel %vm57, %v102, 0
  %106 = vmatpush.msra.mxu0 0.0
  %107 = vmatpush.msra.mxu0 0.0
  %108 = vmatpush.msra.mxu0 0.0
  %109 = vmatpush.msra.mxu0 0.0
  %110 = vmatpush.msra.mxu0 0.0
  %111 = vmatpush.msra.mxu0 0.0
  %112 = vmatpush.msra.mxu0 0.0
  %113 = vmatpush.msra.mxu0 0.0
  %114 = vmatpush.msra.mxu0 0.0
  %115 = vmatpush.msra.mxu0 0.0
  %116 = vmatpush.msra.mxu0 0.0
  %117 = vmatpush.msra.mxu0 0.0
  %118 = vmatpush.msra.mxu0 0.0
  %119 = vmatpush.msra.mxu0 0.0
  %120 = vmatpush.msra.mxu0 0.0
  %121 = vmatpush.msra.mxu0 %v104
  %122 = vmatmul.f32.gmra.mxu0 %v34
  %v123 = vpop.f32.mrf.mxu0
  %v124 = vadd.f32 0.0, %v123
  %125 = vmatmul.f32.gmra.mxu0 %v37
  %v126 = vpop.f32.mrf.mxu0
  %v127 = vadd.f32 0.0, %v126
  %128 = vmatmul.f32.gmra.mxu0 %v40
  %v129 = vpop.f32.mrf.mxu0
  %v130 = vadd.f32 0.0, %v129
  %131 = vmatmul.f32.gmra.mxu0 %v43
  %v132 = vpop.f32.mrf.mxu0
  %v133 = vadd.f32 0.0, %v132
  %134 = vmatmul.f32.gmra.mxu0 %v46
  %v135 = vpop.f32.mrf.mxu0
  %v136 = vadd.f32 0.0, %v135
  %137 = vmatmul.f32.gmra.mxu0 %v49
  %v138 = vpop.f32.mrf.mxu0
  %v139 = vadd.f32 0.0, %v138
  %140 = vmatmul.f32.gmra.mxu0 %v52
  %v141 = vpop.f32.mrf.mxu0
  %v142 = vadd.f32 0.0, %v141
  %143 = vmatmul.f32.gmra.mxu0 %v55
  %v144 = vpop.f32.mrf.mxu0
  %v145 = vadd.f32 0.0, %v144
  %146 = vdwg.mxu0
  %v147 = vmul.f32 %v79, %v124
  %v148 = vmul.f32 %v82, %v127
  %v149 = vmul.f32 %v85, %v130
  %v150 = vmul.f32 %v88, %v133
  %v151 = vmul.f32 %v91, %v136
  %v152 = vmul.f32 %v94, %v139
  %v153 = vmul.f32 %v97, %v142
  %v154 = vmul.f32 %v100, %v145
  %155 = vst.msk [vmem:[%s5] sm:$0xff] %vm32, %v147
  %156 = vst.msk [vmem:[%s5 + $0x8] sm:$0xff] %vm32, %v148
  %157 = vst.msk [vmem:[%s5 + $0x10] sm:$0xff] %vm32, %v149
  %158 = vst.msk [vmem:[%s5 + $0x18] sm:$0xff] %vm32, %v150
  %159 = vst.msk [vmem:[%s5 + $0x20] sm:$0xff] %vm32, %v151
  %160 = vst.msk [vmem:[%s5 + $0x28] sm:$0xff] %vm32, %v152
  %161 = vst.msk [vmem:[%s5 + $0x30] sm:$0xff] %vm32, %v153
  %162 = vst.msk [vmem:[%s5 + $0x38] sm:$0xff] %vm32, %v154
  %v163 = vld [vmem:[%s3] sm:$0xf]
  %v165 = vsel %vm57, %v163, 0
  %167 = vmatpush.msra.mxu0 0.0
  %168 = vmatpush.msra.mxu0 0.0
  %169 = vmatpush.msra.mxu0 0.0
  %170 = vmatpush.msra.mxu0 0.0
  %171 = vmatpush.msra.mxu0 0.0
  %172 = vmatpush.msra.mxu0 0.0
  %173 = vmatpush.msra.mxu0 0.0
  %174 = vmatpush.msra.mxu0 0.0
  %175 = vmatpush.msra.mxu0 0.0
  %176 = vmatpush.msra.mxu0 0.0
  %177 = vmatpush.msra.mxu0 0.0
  %178 = vmatpush.msra.mxu0 0.0
  %179 = vmatpush.msra.mxu0 0.0
  %180 = vmatpush.msra.mxu0 0.0
  %181 = vmatpush.msra.mxu0 0.0
  %182 = vmatpush.msra.mxu0 %v165
  %183 = vmatmul.f32.gmra.mxu0 %v34
  %v184 = vpop.f32.mrf.mxu0
  %v185 = vadd.f32 0.0, %v184
  %186 = vmatmul.f32.gmra.mxu0 %v37
  %v187 = vpop.f32.mrf.mxu0
  %v188 = vadd.f32 0.0, %v187
  %189 = vmatmul.f32.gmra.mxu0 %v40
  %v190 = vpop.f32.mrf.mxu0
  %v191 = vadd.f32 0.0, %v190
  %192 = vmatmul.f32.gmra.mxu0 %v43
  %v193 = vpop.f32.mrf.mxu0
  %v194 = vadd.f32 0.0, %v193
  %195 = vmatmul.f32.gmra.mxu0 %v46
  %v196 = vpop.f32.mrf.mxu0
  %v197 = vadd.f32 0.0, %v196
  %198 = vmatmul.f32.gmra.mxu0 %v49
  %v199 = vpop.f32.mrf.mxu0
  %v200 = vadd.f32 0.0, %v199
  %201 = vmatmul.f32.gmra.mxu0 %v52
  %v202 = vpop.f32.mrf.mxu0
  %v203 = vadd.f32 0.0, %v202
  %204 = vmatmul.f32.gmra.mxu0 %v55
  %v205 = vpop.f32.mrf.mxu0
  %v206 = vadd.f32 0.0, %v205
  %207 = vdwg.mxu0
  %208 = vst.msk [vmem:[%s6] sm:$0xff] %vm32, %v185
  %209 = vst.msk [vmem:[%s6 + $0x8] sm:$0xff] %vm32, %v188
  %210 = vst.msk [vmem:[%s6 + $0x10] sm:$0xff] %vm32, %v191
  %211 = vst.msk [vmem:[%s6 + $0x18] sm:$0xff] %vm32, %v194
  %212 = vst.msk [vmem:[%s6 + $0x20] sm:$0xff] %vm32, %v197
  %213 = vst.msk [vmem:[%s6 + $0x28] sm:$0xff] %vm32, %v200
  %214 = vst.msk [vmem:[%s6 + $0x30] sm:$0xff] %vm32, %v203
  %215 = vst.msk [vmem:[%s6 + $0x38] sm:$0xff] %vm32, %v206
  %v216 = vld [vmem:[%s4] sm:$0xf]
  %v218 = vsel %vm57, %v216, 0
  %220 = vmatpush.msra.mxu0 0.0
  %221 = vmatpush.msra.mxu0 0.0
  %222 = vmatpush.msra.mxu0 0.0
  %223 = vmatpush.msra.mxu0 0.0
  %224 = vmatpush.msra.mxu0 0.0
  %225 = vmatpush.msra.mxu0 0.0
  %226 = vmatpush.msra.mxu0 0.0
  %227 = vmatpush.msra.mxu0 0.0
  %228 = vmatpush.msra.mxu0 0.0
  %229 = vmatpush.msra.mxu0 0.0
  %230 = vmatpush.msra.mxu0 0.0
  %231 = vmatpush.msra.mxu0 0.0
  %232 = vmatpush.msra.mxu0 0.0
  %233 = vmatpush.msra.mxu0 0.0
  %234 = vmatpush.msra.mxu0 0.0
  %235 = vmatpush.msra.mxu0 %v218
  %236 = vmatmul.f32.gmra.mxu0 %v34
  %v237 = vpop.f32.mrf.mxu0
  %v238 = vadd.f32 0.0, %v237
  %239 = vmatmul.f32.gmra.mxu0 %v37
  %v240 = vpop.f32.mrf.mxu0
  %v241 = vadd.f32 0.0, %v240
  %242 = vmatmul.f32.gmra.mxu0 %v40
  %v243 = vpop.f32.mrf.mxu0
  %v244 = vadd.f32 0.0, %v243
  %245 = vmatmul.f32.gmra.mxu0 %v43
  %v246 = vpop.f32.mrf.mxu0
  %v247 = vadd.f32 0.0, %v246
  %248 = vmatmul.f32.gmra.mxu0 %v46
  %v249 = vpop.f32.mrf.mxu0
  %v250 = vadd.f32 0.0, %v249
  %251 = vmatmul.f32.gmra.mxu0 %v49
  %v252 = vpop.f32.mrf.mxu0
  %v253 = vadd.f32 0.0, %v252
  %254 = vmatmul.f32.gmra.mxu0 %v52
  %v255 = vpop.f32.mrf.mxu0
  %v256 = vadd.f32 0.0, %v255
  %257 = vmatmul.f32.gmra.mxu0 %v55
  %v258 = vpop.f32.mrf.mxu0
  %v259 = vadd.f32 0.0, %v258
  %260 = vdwg.mxu0
  %261 = vst.msk [vmem:[%s7] sm:$0xff] %vm32, %v238
  %262 = vst.msk [vmem:[%s7 + $0x8] sm:$0xff] %vm32, %v241
  %263 = vst.msk [vmem:[%s7 + $0x10] sm:$0xff] %vm32, %v244
  %264 = vst.msk [vmem:[%s7 + $0x18] sm:$0xff] %vm32, %v247
  %265 = vst.msk [vmem:[%s7 + $0x20] sm:$0xff] %vm32, %v250
  %266 = vst.msk [vmem:[%s7 + $0x28] sm:$0xff] %vm32, %v253
  %267 = vst.msk [vmem:[%s7 + $0x30] sm:$0xff] %vm32, %v256
  %268 = vst.msk [vmem:[%s7 + $0x38] sm:$0xff] %vm32, %v259
  // Predicated region
  $region22: #{tpu_custom_call.1} parent=0 // pred_check
    _
  $region23: #{tpu_custom_call.1} parent=0 // pred_check_branch
    %270 = sbr.rel (0) target = $region25
  $region24: #{tpu_custom_call.1} parent=0 // pred_region
    _
  $region25: #{tpu_custom_call.1} parent=0 // pred_fallthru
    _
  // Predicated region
  $region26: #{tpu_custom_call.1} parent=0 // pred_check
    _
  $region27: #{tpu_custom_call.1} parent=0 // pred_check_branch
    %272 = sbr.rel (0) target = $region29
  $region28: #{tpu_custom_call.1} parent=0 // pred_region
    _
  $region29: #{tpu_custom_call.1} parent=0 // pred_fallthru
    _
  // Predicated region
  $region30: #{tpu_custom_call.1} parent=0 // pred_check
    _
  $region31: #{tpu_custom_call.1} parent=0 // pred_check_branch
    %274 = sbr.rel (0) target = $region33
  $region32: #{tpu_custom_call.1} parent=0 // pred_region
    _
  $region33: #{tpu_custom_call.1} parent=0 // pred_fallthru
    _
  // Predicated region
  $region34: #{tpu_custom_call.1} parent=0 // pred_check
    _
  $region35: #{tpu_custom_call.1} parent=0 // pred_check_branch
    %276 = sbr.rel (0) target = $region37
  $region36: #{tpu_custom_call.1} parent=0 // pred_region
    _
  $region37: #{tpu_custom_call.1} parent=0 // pred_fallthru
    _
  // Predicated region
  $region38: #{tpu_custom_call.1} parent=0 // pred_check
    _
  $region39: #{tpu_custom_call.1} parent=0 // pred_check_branch
    %278 = sbr.rel (0) target = $region41
  $region40: #{tpu_custom_call.1} parent=0 // pred_region
    _
  $region41: #{tpu_custom_call.1} parent=0 // pred_fallthru
    _
  // Predicated region
  $region42: #{tpu_custom_call.1} parent=0 // pred_check
    _
  $region43: #{tpu_custom_call.1} parent=0 // pred_check_branch
    %280 = sbr.rel (0) target = $region45
  $region44: #{tpu_custom_call.1} parent=0 // pred_region
    _
  $region45: #{tpu_custom_call.1} parent=0 // pred_fallthru
    _

</llo_original>
